<compile_context>
chip_gen: v7x
topology: tpu7x:2x2x1
jax: 0.10.0
libtpu: 0.0.40
codegen_flags: <defaults>
</compile_context>

<pallas_src>
import functools
import math

import jax
import jax.numpy as jnp
from jax.experimental import pallas as pl
from jax.experimental.pallas import tpu as pltpu

# Keep the wrapper/reference matmuls in full f32 so the tolerance check is tight.
jax.config.update("jax_default_matmul_precision", "highest")


# ----------------------------------------------------------------------------
# In-kernel DMA row gather: rows[t, :] = lut[ids[b, base + t], :]
# ----------------------------------------------------------------------------
def _gather_rows(ids_smem, lut_hbm, rows, sem, *, base, tm):
    bidx = pl.program_id(0)

    @pl.loop(0, tm)
    def _issue(t):
        tok = ids_smem[bidx, base + t]
        pltpu.make_async_copy(
            lut_hbm.at[pl.ds(tok, 1), :],
            rows.at[pl.ds(t, 1), :],
            sem.at[0],
        ).start()

    @pl.loop(0, tm)
    def _drain(t):
        pltpu.make_async_copy(
            lut_hbm.at[pl.ds(0, 1), :],       # same-shaped descriptor for the wait
            rows.at[pl.ds(t, 1), :],
            sem.at[0],
        ).wait()


# ----------------------------------------------------------------------------
# Kernels
# ----------------------------------------------------------------------------
def _embed_seq_esm_kernel(ids_smem, tgt_ref, lut_hbm, out_ref, rows, sem, *, tm):
    """out[b, j*tm : (j+1)*tm, :] = lut_fused[ids] + tgt_bias[b]"""
    j = pl.program_id(1)
    _gather_rows(ids_smem, lut_hbm, rows, sem, base=j * tm, tm=tm)
    # rows: (TM, D) gathered fused-embedding rows; tgt_ref: (1, D) per-batch bias.
    out_ref[...] = rows[...] + tgt_ref[...]


def _embed_base_kernel(ids_smem, lut_hbm, out_ref, rows, sem, *, tm):
    """out[b, j*tm : (j+1)*tm, :] = (lut * sqrt(D))[ids]   (gather + copy only)"""
    j = pl.program_id(1)
    _gather_rows(ids_smem, lut_hbm, rows, sem, base=j * tm, tm=tm)
    out_ref[...] = rows[...]


# ----------------------------------------------------------------------------
# Wrapper
# ----------------------------------------------------------------------------
def _pick_token_tile(s: int) -> int:
    """Largest multiple-of-8 divisor of S, capped at 512 (>=256 when S allows)."""
    tm = None
    for cand in range(8, min(s, 512) + 1, 8):
        if s % cand == 0:
            tm = cand
    if tm is None:
        raise ValueError("sequence length must have a multiple-of-8 divisor")
    return tm


@functools.partial(jax.jit, static_argnames=("seq_esm",))
def embeddings_forward(x, target_vec, lut, w, b, *, seq_esm=True):
    """Pallas forward of Embeddings.

    x          : int32 [B, S]
    target_vec : f32   [B, E]
    lut        : f32   [V, D]
    w          : f32   [D, E + D]   (torch nn.Linear weight layout)
    b          : f32   [D]
    """
    B, S = x.shape
    V, D = lut.shape
    TM = _pick_token_tile(S)
    grid = (B, S // TM)

    # Clamp dirty ids (PyTorch would raise; a raw DMA gather would read garbage).
    ids = jnp.clip(x.astype(jnp.int32), 0, V - 1)
    scale = jnp.float32(math.sqrt(D))

    compiler_params = pltpu.CompilerParams(
        dimension_semantics=("parallel", "parallel"))
    scratch_shapes = [pltpu.VMEM((TM, D), jnp.float32),
                      pltpu.SemaphoreType.DMA((1,))]
    out_spec = pl.BlockSpec((None, TM, D), lambda bb, j, ids_ref: (bb, j, 0))
    out_shape = jax.ShapeDtypeStruct((B, S, D), jnp.float32)

    if not seq_esm:
        # Fold sqrt(D) into the table; kernel is a pure DMA gather + copy.
        table = lut.astype(jnp.float32) * scale                       # (V, D)
        grid_spec = pltpu.PrefetchScalarGridSpec(
            num_scalar_prefetch=1,
            grid=grid,
            in_specs=[pl.BlockSpec(memory_space=pl.ANY)],             # table in HBM
            out_specs=out_spec,
            scratch_shapes=scratch_shapes,
        )
        return pl.pallas_call(
            functools.partial(_embed_base_kernel, tm=TM),
            out_shape=out_shape,
            grid_spec=grid_spec,
            compiler_params=compiler_params,
        )(ids, table)

    # Pre-fuse the embed projection into the table (one-time V x D x D matmul),
    # and hoist the S-independent target projection + bias out of the kernel.
    lut_fused = (lut.astype(jnp.float32) * scale) @ w[:, :D].T        # (V, D)
    tgt_bias = target_vec.astype(jnp.float32) @ w[:, D:].T + b        # (B, D)
    tgt_bias = tgt_bias.reshape(B, 1, D)                              # tile-friendly

    grid_spec = pltpu.PrefetchScalarGridSpec(
        num_scalar_prefetch=1,
        grid=grid,
        in_specs=[
            pl.BlockSpec((None, 1, D), lambda bb, j, ids_ref: (bb, 0, 0)),  # tgt_bias
            pl.BlockSpec(memory_space=pl.ANY),                              # fused table (HBM)
        ],
        out_specs=out_spec,
        scratch_shapes=scratch_shapes,
    )
    return pl.pallas_call(
        functools.partial(_embed_seq_esm_kernel, tm=TM),
        out_shape=out_shape,
        grid_spec=grid_spec,
        compiler_params=compiler_params,
    )(ids, tgt_bias, lut_fused)


# ----------------------------------------------------------------------------
# Pure-JAX reference (mirrors the PyTorch forward)
# ----------------------------------------------------------------------------
def embeddings_reference(x, target_vec, lut, w, b, *, seq_esm=True):
    D = lut.shape[1]
    torch_embed = lut[x] * math.sqrt(D)                               # (B, S, D)
    if not seq_esm:
        return torch_embed
    S = x.shape[1]
    tgt = jnp.broadcast_to(target_vec[:, None, :],
                           (x.shape[0], S, target_vec.shape[1]))
    embed_seq = jnp.concatenate((torch_embed, tgt), axis=-1)          # (B, S, D+E)
    return embed_seq @ w.T + b


# ----------------------------------------------------------------------------
# Main
# ----------------------------------------------------------------------------
if __name__ == "__main__":
    B, S = 2, 128        # batch, sequence length
    V = 64               # vocab
    D = 128              # d_model (128 lanes -> lane-dense stores)
    E = 32               # esm_size

    key = jax.random.PRNGKey(0)
    k_ids, k_tgt, k_lut, k_w, k_b = jax.random.split(key, 5)

    x = jax.random.randint(k_ids, (B, S), 0, V, dtype=jnp.int32)
    target_vec = jax.random.normal(k_tgt, (B, E), dtype=jnp.float32)

    # Deterministic synthetic parameters (not a checkpoint load).
    lut = jax.random.normal(k_lut, (V, D), dtype=jnp.float32)             # nn.Embedding
    w = jax.random.normal(k_w, (D, E + D), dtype=jnp.float32) * 0.05      # nn.Linear weight
    b = jax.random.normal(k_b, (D,), dtype=jnp.float32) * 0.05            # nn.Linear bias

    # seq_esm path: embedding gather + (fused) linear, inside the kernel.
    out = jax.block_until_ready(
        embeddings_forward(x, target_vec, lut, w, b, seq_esm=True))
    ref = embeddings_reference(x, target_vec, lut, w, b, seq_esm=True)
    assert out.shape == (B, S, D)
    assert jnp.allclose(out, ref, atol=1e-3, rtol=1e-3), "seq_esm mismatch"

    # base path: embedding lookup * sqrt(d_model) only (gather + copy).
    out_base = jax.block_until_ready(
        embeddings_forward(x, target_vec, lut, w, b, seq_esm=False))
    ref_base = embeddings_reference(x, target_vec, lut, w, b, seq_esm=False)
    assert jnp.allclose(out_base, ref_base, atol=1e-3, rtol=1e-3), "base mismatch"

    print("KERNEL_OK")
</pallas_src>

<mosaic_0001>
module attributes {stable_mosaic.version = 11 : i64} {
  func.func @_embed_seq_esm_kernel(%arg0: i32, %arg1: i32, %arg2: memref<2x128xi32, #tpu.memory_space<smem>>, %arg3: memref<1x1x128xf32, #tpu.memory_space<vmem>>, %arg4: memref<64x128xf32, #tpu.memory_space<any>>, %arg5: memref<1x128x128xf32, #tpu.memory_space<vmem>>, %arg6: memref<128x128xf32, #tpu.memory_space<vmem>>, %arg7: memref<1x!tpu.dma_semaphore, #tpu.memory_space<semaphore_mem>>) attributes {dimension_semantics = [#tpu.dimension_semantics<parallel>, #tpu.dimension_semantics<parallel>], iteration_bounds = array<i64: 2, 1>, scalar_prefetch = 1 : i64, scratch_operands = 2 : i64, tpu.core_type = #tpu.core_type<tc>, window_params = [{transform_indices = @transform_0, window_bounds = array<i64: 1, 1, 128>}, {}, {transform_indices = @transform_2, window_bounds = array<i64: 1, 128, 128>}]} {
    %c128_i32 = arith.constant 128 : i32
    %0 = arith.muli %arg1, %c128_i32 : i32
    %c0_i32 = arith.constant 0 : i32
    %c128_i32_0 = arith.constant 128 : i32
    %1 = arith.addi %c0_i32, %c128_i32_0 : i32
    %c1_i32 = arith.constant 1 : i32
    scf.for %arg8 = %c0_i32 to %1 step %c1_i32  : i32 {
      %c1_i32_13 = arith.constant 1 : i32
      %11 = arith.muli %arg8, %c1_i32_13 : i32
      %c0_i32_14 = arith.constant 0 : i32
      %12 = arith.addi %c0_i32_14, %11 : i32
      %13 = arith.addi %0, %12 : i32
      %14 = arith.index_cast %arg0 : i32 to index
      %15 = arith.index_cast %13 : i32 to index
      %16 = memref.load %arg2[%14, %15] : memref<2x128xi32, #tpu.memory_space<smem>>
      %c0_i32_15 = arith.constant 0 : i32
      %c0_i32_16 = arith.constant 0 : i32
      %17 = tpu.memref_slice %arg4[%16, %c0_i32_16] : memref<64x128xf32, #tpu.memory_space<any>> -> memref<1x128xf32, #tpu.memory_space<any>>
      %c0_i32_17 = arith.constant 0 : i32
      %18 = tpu.memref_slice %arg6[%12, %c0_i32_17] : memref<128x128xf32, #tpu.memory_space<vmem>> -> memref<1x128xf32, #tpu.memory_space<vmem>>
      %19 = tpu.memref_slice %arg7[%c0_i32_15] : memref<1x!tpu.dma_semaphore, #tpu.memory_space<semaphore_mem>> -> memref<1x!tpu.dma_semaphore, #tpu.memory_space<semaphore_mem>>
      %20 = tpu.memref_squeeze %19 : memref<1x!tpu.dma_semaphore, #tpu.memory_space<semaphore_mem>> -> memref<!tpu.dma_semaphore, #tpu.memory_space<semaphore_mem>>
      tpu.enqueue_dma source(%17 : memref<1x128xf32, #tpu.memory_space<any>>) target(%18 : memref<1x128xf32, #tpu.memory_space<vmem>>) target_semaphore(%20 : memref<!tpu.dma_semaphore, #tpu.memory_space<semaphore_mem>>)
    }
    %c128_i32_1 = arith.constant 128 : i32
    %c0_i32_2 = arith.constant 0 : i32
    %c128_i32_3 = arith.constant 128 : i32
    %2 = arith.addi %c0_i32_2, %c128_i32_3 : i32
    %c1_i32_4 = arith.constant 1 : i32
    scf.for %arg8 = %c0_i32_2 to %2 step %c1_i32_4  : i32 {
      %c1_i32_13 = arith.constant 1 : i32
      %11 = arith.muli %arg8, %c1_i32_13 : i32
      %c0_i32_14 = arith.constant 0 : i32
      %12 = arith.addi %c0_i32_14, %11 : i32
      %c0_i32_15 = arith.constant 0 : i32
      %c0_i32_16 = arith.constant 0 : i32
      %c0_i32_17 = arith.constant 0 : i32
      %13 = tpu.memref_slice %arg4[%c0_i32_16, %c0_i32_17] : memref<64x128xf32, #tpu.memory_space<any>> -> memref<1x128xf32, #tpu.memory_space<any>>
      %c0_i32_18 = arith.constant 0 : i32
      %14 = tpu.memref_slice %arg6[%12, %c0_i32_18] : memref<128x128xf32, #tpu.memory_space<vmem>> -> memref<1x128xf32, #tpu.memory_space<vmem>>
      %15 = tpu.memref_slice %arg7[%c0_i32_15] : memref<1x!tpu.dma_semaphore, #tpu.memory_space<semaphore_mem>> -> memref<1x!tpu.dma_semaphore, #tpu.memory_space<semaphore_mem>>
      %16 = tpu.memref_squeeze %15 : memref<1x!tpu.dma_semaphore, #tpu.memory_space<semaphore_mem>> -> memref<!tpu.dma_semaphore, #tpu.memory_space<semaphore_mem>>
      tpu.wait_dma2 semaphore(%16 : memref<!tpu.dma_semaphore, #tpu.memory_space<semaphore_mem>>) src(%13 : memref<1x128xf32, #tpu.memory_space<any>>) dst(%14 : memref<1x128xf32, #tpu.memory_space<vmem>>)
    }
    %c128_i32_5 = arith.constant 128 : i32
    %c0 = arith.constant 0 : index
    %c0_6 = arith.constant 0 : index
    %3 = vector.load %arg6[%c0, %c0_6] : memref<128x128xf32, #tpu.memory_space<vmem>>, vector<128x128xf32>
    %c0_7 = arith.constant 0 : index
    %c0_8 = arith.constant 0 : index
    %c0_9 = arith.constant 0 : index
    %4 = vector.load %arg3[%c0_7, %c0_8, %c0_9] : memref<1x1x128xf32, #tpu.memory_space<vmem>>, vector<1x1x128xf32>
    %5 = vector.shape_cast %4 : vector<1x1x128xf32> to vector<1x128xf32>
    %6 = vector.broadcast %5 : vector<1x128xf32> to vector<128x128xf32>
    %7 = arith.addf %3, %6 : vector<128x128xf32>
    %c0_10 = arith.constant 0 : index
    %c0_11 = arith.constant 0 : index
    %c0_12 = arith.constant 0 : index
    %8 = vector.load %arg5[%c0_10, %c0_11, %c0_12] : memref<1x128x128xf32, #tpu.memory_space<vmem>>, vector<1x128x128xf32>
    %9 = vector.shape_cast %8 : vector<1x128x128xf32> to vector<128x128xf32>
    %10 = vector.shape_cast %7 : vector<128x128xf32> to vector<1x128x128xf32>
    tpu.vector_store %arg5[%c0_10, %c0_11, %c0_12], %10 {strides = array<i32>} : memref<1x128x128xf32, #tpu.memory_space<vmem>>, vector<1x128x128xf32>,
    return
  }
  func.func @transform_0(%arg0: i32, %arg1: i32, %arg2: memref<2x128xi32, #tpu.memory_space<smem>>) -> (i32, i32, i32) {
    %c0_i32 = arith.constant 0 : i32
    %c0_i32_0 = arith.constant 0 : i32
    %c0_i32_1 = arith.constant 0 : i32
    return %arg0, %c0_i32, %c0_i32_0 : i32, i32, i32
  }
  func.func @transform_2(%arg0: i32, %arg1: i32, %arg2: memref<2x128xi32, #tpu.memory_space<smem>>) -> (i32, i32, i32) {
    %c0_i32 = arith.constant 0 : i32
    %c0_i32_0 = arith.constant 0 : i32
    return %arg0, %arg1, %c0_i32 : i32, i32, i32
  }
}

</mosaic_0001>

<llo_original>
// kernel: embeddings_forward.1
$region0: #{embeddings_forward.1}
  #allocation0 [shape = 'u32[]', space=smem, size = 0x4, offset = 0x4, fixed_abs, tag = 'smem constant byte address 0x4 - core index']
  #allocation1 [shape = 'u32[144,128]{1,0:T(1,128)}', space=vmem, size = 0x12000, scoped, tag = 'internal scratch']
  #allocation2 [shape = 'f32[128,128]{1,0:T(8,128)}', space=vmem, size = 0x10000, scoped, tag = 'scratch operand']
  #allocation3 [shape = 's32[1]{0}', space=sflag, size = 0x4, scoped, tag = 'scratch operand']
  #allocation4 [shape = 's32[1]{0}', space=sflag, size = 0x4, scoped, tag = 'scoped memory for embeddings_forward.1']
  #allocation5 [shape = 'u8[1024]{0}', space=smem, size = 0x400, scoped, tag = 'prefetched SMEM operand 0']
  #allocation8 [shape = 's32[]', space=sflag, size = 0x4, offset = 0, fixed_abs, tag = 'sflag constant byte address 0x0 - dummy sync flag']
  %s0 = inlined_call_operand.vmem [shape: s32[2,128], index: 0, kind: input, shape index: {}]
  %s1 = inlined_call_operand.vmem [shape: f32[2,1,128], index: 1, kind: input, shape index: {}]
  %s2 = inlined_call_operand.vmem [shape: f32[64,128], index: 2, kind: input, shape index: {}]
  %s3 = inlined_call_operand.hbm [shape: f32[2,128,128], index: 3, kind: output, shape index: {}]
  %s4 = sld [smem:[#allocation0]]
  $region81: #{embeddings_forward.1} parent=0
    _
  %s6 = ssub.s32 1, %s4
  %s7 = scalar_select 0, %s6, %s4
  %s8 = sshll.u32 %s0, 4
  %s9 = int_to_ptr.vmem [resolvable:$true] %s8
  %11 = dma.vmem_to_smem %s9, 32, [#allocation5], [#allocation4]
  %12 = dma.done [#allocation4], 32
  %13 = sfence
  $region1: #{embeddings_forward.1} parent=0
    #allocation6 [shape = 'u8[131072]{0}', space=vmem, size = 0x20000, scoped, tag = 'output window, operand 0']
    #allocation7 [shape = 's32[2]{0}', space=sflag, size = 0x8, scoped, tag = 'scoped memory for embeddings_forward.1']
    %14 = vsyncpa [#allocation7], 0
    %s15 = scalar_lea.sflag [#allocation7], 1
    %16 = vsyncpa %s15, 0
    loop: start=0, step=1, limit=4
    $region2: #{embeddings_forward.1} parent=1 // loop_pre_header
      _
    $region3: #{embeddings_forward.1} parent=1 // loop_header
      %s18 = sphi 0, %s22
      %p19 = scmp.ge.s32.totalorder %s18, 4
      %s25 = sphi 0, %s37
      %s26 = sphi 0, %s33
      %s27 = sphi 0, %s25
      %s28 = sphi 0, %s26
      %s29 = sphi 0, %s27
      %s30 = sphi 0, %s28
      %s40 = sphi 0, %s42
      %s43 = sphi 0, %s40
      %s44 = sphi 0, %s43
      %s60 = sphi 0, %s44
      %s68 = sphi 0, %s70
      %s71 = sphi 0, %s68
      %s72 = sphi 0, %s71
      %s88 = sphi 0, %s72
    $region4: #{embeddings_forward.1} parent=1 // loop_header_branch
      %21 = sbr.rel (%p19) target = $region8
    $region5: #{embeddings_forward.1} parent=1 // loop_body
      %s23 = ssub.s32 %s18, 1
      %s24 = ssub.s32 %s18, 2
      %s31 = sadd.s32 1, %s26
      %p32 = scmp.ge.s32.totalorder %s31, 1
      %s33 = scalar_select %p32, 0, %s31
      %s34 = sadd.s32 1, %s25
      %s35 = scalar_select %p32, %s34, %s25
      %p36 = scmp.ge.s32.totalorder %s35, 2
      %s37 = scalar_select %p36, 0, %s35
      %s38 = ssub.s32 %s25, %s37
      %p39 = scmp.eq.s32.totalorder %s38, 0
      %s41 = sadd.s32 %s40, 1
      %s42 = scalar_select %p39, %s40, %s41
      %p45 = pneg %p39
      %p46 = scmp.eq.s32.totalorder %s18, 1
      %p47 = por %p45, %p46
      %p48 = scmp.ne.s32.totalorder %s40, %s43
      %p49 = scmp.eq.s32.totalorder %s18, 0
      %p50 = por %p48, %p49
      %p51 = scmp.ne.s32.totalorder %s40, %s43
      %p52 = scmp.eq.s32.totalorder %s23, 1
      %p53 = por %p51, %p52
      %p54 = scmp.ne.s32.totalorder %s43, %s44
      %p55 = scmp.eq.s32.totalorder %s23, 0
      %p56 = por %p54, %p55
      %p57 = scmp.ne.s32.totalorder %s43, %s44
      %p58 = scmp.eq.s32.totalorder %s24, 1
      %p59 = por %p57, %p58
      %p61 = scmp.ne.s32.totalorder %s44, %s60
      %p62 = scmp.eq.s32.totalorder %s24, 0
      %p63 = por %p61, %p62
      %s64 = ssub.s32 %s25, %s37
      %s65 = ssub.s32 %s26, %s33
      %s66 = sor.u32 %s64, %s65
      %p67 = scmp.eq.s32.totalorder %s66, 0
      %s69 = sadd.s32 %s68, 1
      %s70 = scalar_select %p67, %s68, %s69
      %p73 = pneg %p67
      %p74 = scmp.eq.s32.totalorder %s18, 1
      %p75 = por %p73, %p74
      %p76 = scmp.ne.s32.totalorder %s68, %s71
      %p77 = scmp.eq.s32.totalorder %s18, 0
      %p78 = por %p76, %p77
      %p79 = scmp.ne.s32.totalorder %s68, %s71
      %p80 = scmp.eq.s32.totalorder %s23, 1
      %p81 = por %p79, %p80
      %p82 = scmp.ne.s32.totalorder %s71, %s72
      %p83 = scmp.eq.s32.totalorder %s23, 0
      %p84 = por %p82, %p83
      %p85 = scmp.ne.s32.totalorder %s71, %s72
      %p86 = scmp.eq.s32.totalorder %s24, 1
      %p87 = por %p85, %p86
      %p89 = scmp.ne.s32.totalorder %s72, %s88
      %p90 = scmp.eq.s32.totalorder %s24, 0
      %p91 = por %p89, %p90
      %p92 = scmp.le.s32.totalorder 1, %s18
      %p93 = scmp.lt.s32.totalorder %s18, 3
      %p94 = pnand %p92, %p93
      %p95 = pneg %p94
      // Predicated region
      $region9: #{embeddings_forward.1} parent=5 // pred_check
        _
      $region10: #{embeddings_forward.1} parent=5 // pred_check_branch
        %97 = sbr.rel (%p94) target = $region12
      $region11: #{embeddings_forward.1} parent=5 // pred_region
        %s98 = ssub.s32 %s18, 1
      $region12: #{embeddings_forward.1} parent=5 // pred_fallthru
        _
      %p99 = scmp.lt.s32.totalorder %s18, 2
      // Predicated region
      $region13: #{embeddings_forward.1} parent=5 // pred_check
        %p100 = pneg %p99
      $region14: #{embeddings_forward.1} parent=5 // pred_check_branch
        %102 = sbr.rel (%p100) target = $region16
      $region15: #{embeddings_forward.1} parent=5 // pred_region
        // Predicated region
        $region17: #{embeddings_forward.1} parent=15 // pred_check
          %p103 = pneg %p50
        $region18: #{embeddings_forward.1} parent=15 // pred_check_branch
          %105 = sbr.rel (%p103) target = $region20
        $region19: #{embeddings_forward.1} parent=15 // pred_region
          %p106 = scmp.lt.s32.totalorder %s25, 1
          %s107 = scalar_select %p106, %s25, 1
          %s108 = scalar_lea.vmem %s1, %s107
        $region20: #{embeddings_forward.1} parent=15 // pred_fallthru
          _
      $region16: #{embeddings_forward.1} parent=5 // pred_fallthru
        _
      %p109 = scmp.le.s32.totalorder 1, %s18
      %p110 = scmp.lt.s32.totalorder %s18, 3
      %p111 = pnand %p109, %p110
      %p112 = pneg %p111
      // Predicated region
      $region21: #{embeddings_forward.1} parent=5 // pred_check
        _
      $region22: #{embeddings_forward.1} parent=5 // pred_check_branch
        %114 = sbr.rel (%p111) target = $region24
      $region23: #{embeddings_forward.1} parent=5 // pred_region
        %s115 = ssub.s32 %s18, 1
        %p116 = scmp.lt.s32.totalorder %s27, 1
        %s117 = scalar_select %p116, %s27, 1
        %s118 = scalar_lea.vmem %s1, %s117
        %p119 = pneg %p56
        %p120 = pneg %p53
        %p121 = pneg %p84
        %p122 = pneg %p81
        %s123 = sand.u32 %s71, 1
        %s124 = scalar_lea.sflag [#allocation7], %s123
        %s125 = sand.u32 %s71, 1
        %s126 = smul.addr %s125, 128
        %s127 = scalar_lea.vmem [#allocation6], %s126
        %p128 = scmp.lt.s32.totalorder %s27, 1
        %s129 = scalar_select %p128, %s27, 1
        %s130 = scalar_lea.vmem %s1, %s129
        %s131 = smul.u32 16, %s28
        %s132 = smul.u32 %s28, 128
        loop: start=0, step=1, limit=128
        $region25: #{embeddings_forward.1} parent=23 // loop_pre_header
          _
        $region26: #{embeddings_forward.1} parent=23 // loop_header
          %s134 = sphi 0, %s138
          %p135 = scmp.ge.s32.totalorder %s134, 128
        $region27: #{embeddings_forward.1} parent=23 // loop_header_branch
          %137 = sbr.rel (%p135) target = $region31
        $region28: #{embeddings_forward.1} parent=23 // loop_body
          %s139 = sadd.s32 %s132, %s134
          %s140 = sshra.s32 %s139, 7
          %s141 = sand.u32 %s139, 127
          %s142 = sadd.s32 %s140, %s27
          %s143 = smul.u32 %s142, 128
          %s144 = sshra.s32 %s139, 7
          %s145 = sand.u32 %s139, 127
          %s146 = sadd.s32 %s143, %s145
          %s147 = sld [smem:[#allocation5 + %s146]]
          %s148 = scalar_lea.vmem %s2, %s147
          %s149 = scalar_lea.vmem [#allocation2], %s134
          %p151 = scmp.lt.u32.totalorder 1, 8
          %p152 = pneg %p151
          // Predicated region
          $region32: #{embeddings_forward.1} parent=28 // pred_check
            _
          $region33: #{embeddings_forward.1} parent=28 // pred_check_branch
            %154 = sbr.rel (%p151) target = $region35
          $region34: #{embeddings_forward.1} parent=28 // pred_region
            %s169 = sand.u32 1, 7
            %p170 = scmp.eq.s32.totalorder %s169, 0
            %p171 = pneg %p170
            // Predicated region
            $region47: #{embeddings_forward.1} parent=34 // pred_check
              _
            $region48: #{embeddings_forward.1} parent=34 // pred_check_branch
              %173 = sbr.rel (%p170) target = $region50
            $region49: #{embeddings_forward.1} parent=34 // pred_region
              %s174 = sand.u32 1, 7
              %s175 = ssub.s32 1, %s174
              %s176 = scalar_lea.vmem %s148, %s175
              %s177 = ssub.s32 1, %s174
              %s178 = scalar_lea.vmem %s149, %s177 [#allocation2]
              %s179 = sshllo.u32 0, %s174
              loop: start=0, step=1, limit=1
              $region51: #{embeddings_forward.1} parent=49 // loop_pre_header
                _
              $region52: #{embeddings_forward.1} parent=49 // loop_header
                %s181 = sphi 0, %s185
                %p182 = scmp.ge.s32.totalorder %s181, 1
                %s186 = sphi %s176, %s176
                %s187 = sphi %s178, %s178
              $region53: #{embeddings_forward.1} parent=49 // loop_header_branch
                %184 = sbr.rel (%p182) target = $region57
              $region54: #{embeddings_forward.1} parent=49 // loop_body
                %v188 = vld [vmem:[%s186] sm:%s179]
                %189 = vst [vmem:[%s187] sm:%s179] %v188
              $region55: #{embeddings_forward.1} parent=49 // loop_footer
                %s185 = sadd.s32 1, %s181
              $region56: #{embeddings_forward.1} parent=49 // loop_footer_branch
                %180 = sbr.rel target = $region52
              $region57: #{embeddings_forward.1} parent=49 // loop_exit
                _
            $region50: #{embeddings_forward.1} parent=34 // pred_fallthru
              _
          $region35: #{embeddings_forward.1} parent=28 // pred_fallthru
            _
          // Predicated region
          $region36: #{embeddings_forward.1} parent=28 // pred_check
            %p155 = pneg %p151
          $region37: #{embeddings_forward.1} parent=28 // pred_check_branch
            %157 = sbr.rel (%p155) target = $region39
          $region38: #{embeddings_forward.1} parent=28 // pred_region
            %s158 = sshllo.u32 0, 1
            loop: start=0, step=1, limit=1
            $region40: #{embeddings_forward.1} parent=38 // loop_pre_header
              _
            $region41: #{embeddings_forward.1} parent=38 // loop_header
              %s160 = sphi 0, %s164
              %p161 = scmp.ge.s32.totalorder %s160, 1
              %s165 = sphi %s148, %s148
              %s166 = sphi %s149, %s149
            $region42: #{embeddings_forward.1} parent=38 // loop_header_branch
              %163 = sbr.rel (%p161) target = $region46
            $region43: #{embeddings_forward.1} parent=38 // loop_body
              %v167 = vld [vmem:[%s165] sm:%s158]
              %168 = vst [vmem:[%s166] sm:%s158] %v167
            $region44: #{embeddings_forward.1} parent=38 // loop_footer
              %s164 = sadd.s32 1, %s160
            $region45: #{embeddings_forward.1} parent=38 // loop_footer_branch
              %159 = sbr.rel target = $region41
            $region46: #{embeddings_forward.1} parent=38 // loop_exit
              _
          $region39: #{embeddings_forward.1} parent=28 // pred_fallthru
            _
          // Predicated region
          $region58: #{embeddings_forward.1} parent=28 // pred_check
            _
          $region59: #{embeddings_forward.1} parent=28 // pred_check_branch
            %192 = sbr.rel (0) target = $region61
          $region60: #{embeddings_forward.1} parent=28 // pred_region
            %193 = vsyncadd [#allocation3], 16
          $region61: #{embeddings_forward.1} parent=28 // pred_fallthru
            _
        $region29: #{embeddings_forward.1} parent=23 // loop_footer
          %s138 = sadd.s32 1, %s134
        $region30: #{embeddings_forward.1} parent=23 // loop_footer_branch
          %133 = sbr.rel target = $region26
        $region31: #{embeddings_forward.1} parent=23 // loop_exit
          _
        loop: start=0, step=1, limit=128
        $region62: #{embeddings_forward.1} parent=23 // loop_pre_header
          _
        $region63: #{embeddings_forward.1} parent=23 // loop_header
          %s195 = sphi 0, %s199
          %p196 = scmp.ge.s32.totalorder %s195, 128
        $region64: #{embeddings_forward.1} parent=23 // loop_header_branch
          %198 = sbr.rel (%p196) target = $region68
        $region65: #{embeddings_forward.1} parent=23 // loop_body
          %s200 = smul.u32 1, 1
          %s201 = sshll.u32 %s200, 4
          %202 = dma.done [#allocation3], %s201
        $region66: #{embeddings_forward.1} parent=23 // loop_footer
          %s199 = sadd.s32 1, %s195
        $region67: #{embeddings_forward.1} parent=23 // loop_footer_branch
          %194 = sbr.rel target = $region63
        $region68: #{embeddings_forward.1} parent=23 // loop_exit
          _
        %v203 = vld [vmem:[#allocation2] sm:$0xff]
        %v204 = vld [vmem:[#allocation2 + $0x8] sm:$0xff]
        %v205 = vld [vmem:[#allocation2 + $0x10] sm:$0xff]
        %v206 = vld [vmem:[#allocation2 + $0x18] sm:$0xff]
        %v207 = vld [vmem:[#allocation2 + $0x20] sm:$0xff]
        %v208 = vld [vmem:[#allocation2 + $0x28] sm:$0xff]
        %v209 = vld [vmem:[#allocation2 + $0x30] sm:$0xff]
        %v210 = vld [vmem:[#allocation2 + $0x38] sm:$0xff]
        %v211 = vld [vmem:[#allocation2 + $0x40] sm:$0xff]
        %v212 = vld [vmem:[#allocation2 + $0x48] sm:$0xff]
        %v213 = vld [vmem:[#allocation2 + $0x50] sm:$0xff]
        %v214 = vld [vmem:[#allocation2 + $0x58] sm:$0xff]
        %v215 = vld [vmem:[#allocation2 + $0x60] sm:$0xff]
        %v216 = vld [vmem:[#allocation2 + $0x68] sm:$0xff]
        %v217 = vld [vmem:[#allocation2 + $0x70] sm:$0xff]
        %v218 = vld [vmem:[#allocation2 + $0x78] sm:$0xff]
        %v219 = vld [vmem:[%s130] sm:$0x1]
        %v221 = vlaneseq
        %v222 = vshrl.u32 %v221, 7
        %v223 = vsub.s32 0, %v222
        %v224 = vrot.slane %v219, %v223
        %v226 = vadd.f32 %v203, %v224
        %v227 = vadd.f32 %v204, %v224
        %v228 = vadd.f32 %v205, %v224
        %v229 = vadd.f32 %v206, %v224
        %v230 = vadd.f32 %v207, %v224
        %v231 = vadd.f32 %v208, %v224
        %v232 = vadd.f32 %v209, %v224
        %v233 = vadd.f32 %v210, %v224
        %v234 = vadd.f32 %v211, %v224
        %v235 = vadd.f32 %v212, %v224
        %v236 = vadd.f32 %v213, %v224
        %v237 = vadd.f32 %v214, %v224
        %v238 = vadd.f32 %v215, %v224
        %v239 = vadd.f32 %v216, %v224
        %v240 = vadd.f32 %v217, %v224
        %v241 = vadd.f32 %v218, %v224
        %242 = vst [vmem:[%s127] sm:$0xff] %v226
        %243 = vst [vmem:[%s127 + $0x8] sm:$0xff] %v227
        %244 = vst [vmem:[%s127 + $0x10] sm:$0xff] %v228
        %245 = vst [vmem:[%s127 + $0x18] sm:$0xff] %v229
        %246 = vst [vmem:[%s127 + $0x20] sm:$0xff] %v230
        %247 = vst [vmem:[%s127 + $0x28] sm:$0xff] %v231
        %248 = vst [vmem:[%s127 + $0x30] sm:$0xff] %v232
        %249 = vst [vmem:[%s127 + $0x38] sm:$0xff] %v233
        %250 = vst [vmem:[%s127 + $0x40] sm:$0xff] %v234
        %251 = vst [vmem:[%s127 + $0x48] sm:$0xff] %v235
        %252 = vst [vmem:[%s127 + $0x50] sm:$0xff] %v236
        %253 = vst [vmem:[%s127 + $0x58] sm:$0xff] %v237
        %254 = vst [vmem:[%s127 + $0x60] sm:$0xff] %v238
        %255 = vst [vmem:[%s127 + $0x68] sm:$0xff] %v239
        %256 = vst [vmem:[%s127 + $0x70] sm:$0xff] %v240
        %257 = vst [vmem:[%s127 + $0x78] sm:$0xff] %v241
        %s258 = sand.u32 %s71, 1
        %s259 = scalar_lea.sflag [#allocation7], %s258
        %s260 = sand.u32 %s71, 1
        %s261 = smul.addr %s260, 128
        %s262 = scalar_lea.vmem [#allocation6], %s261
        // Predicated region
        $region69: #{embeddings_forward.1} parent=23 // pred_check
          %p263 = pneg %p81
        $region70: #{embeddings_forward.1} parent=23 // pred_check_branch
          %265 = sbr.rel (%p263) target = $region72
        $region71: #{embeddings_forward.1} parent=23 // pred_region
          %s266 = smul.u32 16, %s28
          %s268 = ssub.s32 2048, 2048
          %269 = vsyncadd %s259, %s268
          %s270 = smul.addr %s27, 16
          %s271 = sadd.s32 %s266, %s270
          %s272 = smul.addr %s271, 128
          %s273 = scalar_lea.hbm %s3, %s272
          %s274 = sshll.u32 %s262, 4
          %s275 = int_to_ptr.vmem [resolvable:$true] %s274
          %280 = dma.vmem_to_hbm [thread:$0]  %s275, 2048, %s273, %s259, 128, 128, 8
        $region72: #{embeddings_forward.1} parent=23 // pred_fallthru
          _
      $region24: #{embeddings_forward.1} parent=5 // pred_fallthru
        _
      %p281 = scmp.le.s32.totalorder 2, %s18
      // Predicated region
      $region73: #{embeddings_forward.1} parent=5 // pred_check
        %p282 = pneg %p281
      $region74: #{embeddings_forward.1} parent=5 // pred_check_branch
        %284 = sbr.rel (%p282) target = $region76
      $region75: #{embeddings_forward.1} parent=5 // pred_region
        %s285 = ssub.s32 %s18, 2
        // Predicated region
        $region77: #{embeddings_forward.1} parent=75 // pred_check
          %p286 = pneg %p87
        $region78: #{embeddings_forward.1} parent=75 // pred_check_branch
          %288 = sbr.rel (%p286) target = $region80
        $region79: #{embeddings_forward.1} parent=75 // pred_region
          %s289 = sand.u32 %s72, 1
          %s290 = scalar_lea.sflag [#allocation7], %s289
          %s291 = sand.u32 %s72, 1
          %s292 = smul.addr %s291, 128
          %s293 = scalar_lea.vmem [#allocation6], %s292
          %294 = dma.done %s290, 2048
        $region80: #{embeddings_forward.1} parent=75 // pred_fallthru
          _
      $region76: #{embeddings_forward.1} parent=5 // pred_fallthru
        _
    $region6: #{embeddings_forward.1} parent=1 // loop_footer
      %s22 = sadd.s32 1, %s18
    $region7: #{embeddings_forward.1} parent=1 // loop_footer_branch
      %17 = sbr.rel target = $region3
    $region8: #{embeddings_forward.1} parent=1 // loop_exit
      _
    %295 = vsyncpa [#allocation7], 1
    %s296 = scalar_lea.sflag [#allocation7], 1
    %297 = vsyncpa %s296, 1
  %298 = vsyncmov [#allocation3]
  %s299 = vpop.sfrf %298
  %p300 = scmp.eq.s32.totalorder %s299, 0
  %p301 = pneg %p300
  %303 = shalt.err (%p301)

</llo_original>
